<compile_context>
chip_gen: v7x
topology: tpu7x:2x2x1
jax: 0.10.0
libtpu: 0.0.40
codegen_flags: <defaults>
</compile_context>

<pallas_src>
import jax
import jax.numpy as jnp
from jax.experimental import pallas as pl
from jax.experimental.pallas import tpu as pltpu


# ---------------------- stage 1: packed nanmean over patches ----------------------

def _nanmean_kernel(x_ref, o_ref):
    # x_ref: [rows, L]  with L = groups * patches (lane dense, L % 128 == 0)
    # o_ref: [rows, groups]  per-feature nanmean; feature id = row_group * groups + k
    L = x_ref.shape[1]
    groups = o_ref.shape[1]
    patches = L // groups

    x = x_ref[...]
    valid = jnp.logical_not(jnp.isnan(x))
    xz = jnp.where(valid, x, jnp.zeros_like(x)).astype(jnp.float32)

    # Segment-sum matrix S[j, g] = 1 iff lane j belongs to feature slot g.
    lane = jax.lax.broadcasted_iota(jnp.int32, (L, groups), 0)
    grp = jax.lax.broadcasted_iota(jnp.int32, (L, groups), 1)
    seg = jnp.logical_and(lane >= grp * patches, lane < (grp + 1) * patches)

    # Per-feature sum of finite values: f32 MXU matmul keeps torch-f32 accuracy.
    total = jnp.dot(xz, seg.astype(jnp.float32), preferred_element_type=jnp.float32)
    # Per-feature count of finite values: 0/1 inputs with f32 accumulation are
    # exact, so the cheaper bf16 MXU path is safe here.
    count = jnp.dot(valid.astype(jnp.bfloat16), seg.astype(jnp.bfloat16),
                    preferred_element_type=jnp.float32)
    # 0/0 -> NaN matches torch.nanmean on all-NaN rows.  Exact divide keeps bit
    # parity with torch; pl.reciprocal(approx=True) would be cheaper but lossy.
    o_ref[...] = total / count


# ---------------------- stage 2: linear head ----------------------

def _linear_kernel(m_ref, w_ref, b_ref, o_ref):
    # m_ref: [bt, F]; w_ref: [n_classes, F] (PyTorch Linear layout, contracted on
    # axis 1 so the wrapper never materializes weight.T); b_ref: [1, n_classes].
    y = jax.lax.dot_general(
        m_ref[...], w_ref[...],
        dimension_numbers=(((1,), (1,)), ((), ())),
        preferred_element_type=jnp.float32,
    )
    o_ref[...] = y + b_ref[...]


# ---------------------- helpers ----------------------

def _next_pow2(n):
    p = 1
    while p < n:
        p *= 2
    return p


def _round_up(n, m):
    return ((n + m - 1) // m) * m


def _vmem_limit_bytes():
    try:
        cap = pltpu.get_tpu_info().vmem_capacity_bytes
    except Exception:
        cap = 64 * 1024 * 1024
    # ~48 MiB on v7x (64 MiB physical), ~96 MiB on v5e/v6e (128 MiB physical).
    return int(min(cap * 3 // 4, 100 * 1024 * 1024))


def _pick_rows(total_rows, max_rows, prefer_two_steps):
    """Largest row tile dividing total_rows that is a multiple of 8 (or the full
    extent) and stays <= max_rows."""
    cap = max(8, min(max_rows, total_rows))
    if prefer_two_steps and total_rows >= 16:
        cap = min(cap, max(8, total_rows // 2))
    best = None
    r = 8
    while r <= cap:
        if total_rows % r == 0:
            best = r
        r += 8
    return best if best is not None else total_rows


# ---------------------- wrapper ----------------------

@jax.jit
def classification_head(x, weight, bias):
    """x: [B, C, D, P]; weight: [n_classes, C*D]; bias: [n_classes] -> [B, n_classes]."""
    B, C, D, P = x.shape
    n_classes = weight.shape[0]
    F = C * D

    # Pack the patch axis so the kernel's minor dim is 256-lane dense.
    if P <= 256:
        p_pad = _next_pow2(P)          # divides 256
        lane_w = 256
    else:
        p_pad = _round_up(P, 256)
        lane_w = p_pad
    groups = lane_w // p_pad           # features packed per kernel row
    f_pad = _round_up(F, groups * 8)   # keep the row count a multiple of 8
    g_tot = f_pad // groups
    rows = B * g_tot

    xp = x.reshape(B, F, P)
    if p_pad != P:
        # NaN padding is ignored by nanmean (excluded from both sum and count).
        xp = jnp.pad(xp, ((0, 0), (0, 0), (0, p_pad - P)), constant_values=jnp.nan)
    if f_pad != F:
        # Zero-padded features give finite means that meet zero weight columns.
        xp = jnp.pad(xp, ((0, 0), (0, f_pad - F), (0, 0)))
    xk = xp.reshape(rows, lane_w)      # free, contiguous reshape: x streamed once

    vmem_limit = _vmem_limit_bytes()
    itemsize = jnp.dtype(x.dtype).itemsize
    # Double-buffered input row + (lane-padded) output row.
    bytes_per_row = 2 * (lane_w * itemsize + max(groups, 128) * 4)
    budget_rows = max(8, (vmem_limit * 7 // 10) // bytes_per_row)
    cap_rows = max(8, (8 * 1024 * 1024) // (lane_w * itemsize))  # <= ~8 MiB x / step
    rt = _pick_rows(rows, min(budget_rows, cap_rows), prefer_two_steps=True)
    assert rows % rt == 0
    assert rt * bytes_per_row <= vmem_limit, "stage-1 tile exceeds VMEM limit"

    mean_packed = pl.pallas_call(
        _nanmean_kernel,
        out_shape=jax.ShapeDtypeStruct((rows, groups), jnp.float32),
        grid=(rows // rt,),
        in_specs=[pl.BlockSpec((rt, lane_w), lambda i: (i, 0))],
        out_specs=pl.BlockSpec((rt, groups), lambda i: (i, 0)),
        compiler_params=pltpu.CompilerParams(
            dimension_semantics=("parallel",),
            vmem_limit_bytes=vmem_limit,
        ),
    )(xk)

    # flatten(start_dim=1): packed rows flatten back to feature order c*D + d.
    mean_flat = mean_packed.reshape(B, f_pad)

    # TODO(synk): dropout is identity in inference mode; no stochastic masking applied.
    w = weight.astype(jnp.float32)
    if f_pad != F:
        w = jnp.pad(w, ((0, 0), (0, f_pad - F)))
    b2 = bias.astype(jnp.float32).reshape(1, n_classes)

    row_bytes2 = 2 * f_pad * 4
    budget_rows2 = max(8, (vmem_limit // 2) // row_bytes2)
    bt2 = _pick_rows(B, budget_rows2, prefer_two_steps=False)
    assert B % bt2 == 0

    logits = pl.pallas_call(
        _linear_kernel,
        out_shape=jax.ShapeDtypeStruct((B, n_classes), jnp.float32),
        grid=(B // bt2,),
        in_specs=[
            pl.BlockSpec((bt2, f_pad), lambda i: (i, 0)),
            pl.BlockSpec((n_classes, f_pad), lambda i: (0, 0)),
            pl.BlockSpec((1, n_classes), lambda i: (0, 0)),
        ],
        out_specs=pl.BlockSpec((bt2, n_classes), lambda i: (i, 0)),
        compiler_params=pltpu.CompilerParams(
            dimension_semantics=("parallel",),
            vmem_limit_bytes=vmem_limit,
        ),
    )(mean_flat, w, b2)
    return logits


if __name__ == "__main__":
    B, C, D, P, n_classes = 2, 4, 32, 16, 2   # small shapes consistent with the module

    key = jax.random.PRNGKey(0)
    kx, kn, kw, kb = jax.random.split(key, 4)

    x = jax.random.normal(kx, (B, C, D, P), dtype=jnp.float32)
    # Sprinkle NaNs deterministically to exercise the nanmean path.
    nan_mask = jax.random.bernoulli(kn, 0.1, (B, C, D, P))
    x = jnp.where(nan_mask, jnp.float32(jnp.nan), x)

    # Synthetic Linear params (weight [n_classes, C*D], bias [n_classes]).
    weight = jax.random.normal(kw, (n_classes, C * D), dtype=jnp.float32) * 0.02
    bias = jax.random.normal(kb, (n_classes,), dtype=jnp.float32) * 0.02

    y = classification_head(x, weight, bias)
    y = jax.block_until_ready(y)

    # Plain-JAX reference: flatten(nanmean(x, -1)) @ W^T + b
    mean_ref = jnp.nanmean(x, axis=-1).reshape(B, C * D)
    y_ref = mean_ref @ weight.T + bias
    assert y.shape == (B, n_classes)
    assert jnp.allclose(y, y_ref, atol=1e-4, rtol=1e-5), (y, y_ref)

    print("KERNEL_OK")
</pallas_src>

<mosaic_0001>
module attributes {stable_mosaic.version = 11 : i64} {
  func.func @_nanmean_kernel(%arg0: i32, %arg1: memref<8x256xf32, #tpu.memory_space<vmem>>, %arg2: memref<8x16xf32, #tpu.memory_space<vmem>>) attributes {dimension_semantics = [#tpu.dimension_semantics<parallel>], iteration_bounds = array<i64: 2>, scalar_prefetch = 0 : i64, scratch_operands = 0 : i64, tpu.core_type = #tpu.core_type<tc>, window_params = [{transform_indices = @transform_0, window_bounds = array<i64: 8, 256>}, {transform_indices = @transform_1, window_bounds = array<i64: 8, 16>}]} {
    %c0 = arith.constant 0 : index
    %c0_0 = arith.constant 0 : index
    %0 = vector.load %arg1[%c0, %c0_0] : memref<8x256xf32, #tpu.memory_space<vmem>>, vector<8x256xf32>
    %1 = arith.cmpf one, %0, %0 : vector<8x256xf32>
    %cst = arith.constant dense<true> : vector<8x256xi1>
    %2 = arith.xori %1, %cst : vector<8x256xi1>
    %cst_1 = arith.constant 0.000000e+00 : f32
    %3 = vector.broadcast %cst_1 : f32 to vector<8x256xf32>
    %4 = arith.select %2, %0, %3 : vector<8x256xi1>, vector<8x256xf32>
    %5 = tpu.iota {dimensions = array<i32: 0>} : vector<256x16xi32>
    %6 = tpu.iota {dimensions = array<i32: 1>} : vector<256x16xi32>
    %c16_i32 = arith.constant 16 : i32
    %7 = vector.broadcast %c16_i32 : i32 to vector<256x16xi32>
    %8 = arith.muli %6, %7 : vector<256x16xi32>
    %9 = arith.cmpi sge, %5, %8 : vector<256x16xi32>
    %c1_i32 = arith.constant 1 : i32
    %10 = vector.broadcast %c1_i32 : i32 to vector<256x16xi32>
    %11 = arith.addi %6, %10 : vector<256x16xi32>
    %c16_i32_2 = arith.constant 16 : i32
    %12 = vector.broadcast %c16_i32_2 : i32 to vector<256x16xi32>
    %13 = arith.muli %11, %12 : vector<256x16xi32>
    %14 = arith.cmpi slt, %5, %13 : vector<256x16xi32>
    %15 = arith.andi %9, %14 : vector<256x16xi1>
    %16 = arith.extui %15 : vector<256x16xi1> to vector<256x16xi32>
    %17 = arith.sitofp %16 : vector<256x16xi32> to vector<256x16xf32>
    %cst_3 = arith.constant dense<0.000000e+00> : vector<8x16xf32>
    %18 = tpu.matmul %4, %17, %cst_3 {dimension_numbers = #tpu.dot_dimension_numbers<[1], [0], [0], [1], [0, 0, 1, 1], [], []>} : vector<8x256xf32>, vector<256x16xf32>, vector<8x16xf32> -> vector<8x16xf32>
    %19 = arith.extui %2 : vector<8x256xi1> to vector<8x256xi32>
    %20 = arith.sitofp %19 : vector<8x256xi32> to vector<8x256xf32>
    %21 = arith.truncf %20 : vector<8x256xf32> to vector<8x256xbf16>
    %22 = arith.extui %15 : vector<256x16xi1> to vector<256x16xi32>
    %23 = arith.sitofp %22 : vector<256x16xi32> to vector<256x16xf32>
    %24 = arith.truncf %23 : vector<256x16xf32> to vector<256x16xbf16>
    %cst_4 = arith.constant dense<0.000000e+00> : vector<8x16xf32>
    %25 = tpu.matmul %21, %24, %cst_4 {dimension_numbers = #tpu.dot_dimension_numbers<[1], [0], [0], [1], [0, 0, 1, 1], [], []>} : vector<8x256xbf16>, vector<256x16xbf16>, vector<8x16xf32> -> vector<8x16xf32>
    %26 = arith.divf %18, %25 : vector<8x16xf32>
    %c0_5 = arith.constant 0 : index
    %c0_6 = arith.constant 0 : index
    %27 = vector.load %arg2[%c0_5, %c0_6] : memref<8x16xf32, #tpu.memory_space<vmem>>, vector<8x16xf32>
    tpu.vector_store %arg2[%c0_5, %c0_6], %26 {strides = array<i32>} : memref<8x16xf32, #tpu.memory_space<vmem>>, vector<8x16xf32>,
    return
  }
  func.func @transform_0(%arg0: i32) -> (i32, i32) {
    %c0_i32 = arith.constant 0 : i32
    %c0_i32_0 = arith.constant 0 : i32
    return %arg0, %c0_i32 : i32, i32
  }
  func.func @transform_1(%arg0: i32) -> (i32, i32) {
    %c0_i32 = arith.constant 0 : i32
    %c0_i32_0 = arith.constant 0 : i32
    return %arg0, %c0_i32 : i32, i32
  }
}

module attributes {stable_mosaic.version = 11 : i64} {
  func.func @_linear_kernel(%arg0: i32, %arg1: memref<2x128xf32, #tpu.memory_space<vmem>>, %arg2: memref<2x128xf32, #tpu.memory_space<vmem>>, %arg3: memref<1x2xf32, #tpu.memory_space<vmem>>, %arg4: memref<2x2xf32, #tpu.memory_space<vmem>>) attributes {dimension_semantics = [#tpu.dimension_semantics<parallel>], iteration_bounds = array<i64: 1>, scalar_prefetch = 0 : i64, scratch_operands = 0 : i64, tpu.core_type = #tpu.core_type<tc>, window_params = [{transform_indices = @transform_0, window_bounds = array<i64: 2, 128>}, {pipeline_mode = #tpu.pipeline_mode<synchronous>, transform_indices = @transform_1, window_bounds = array<i64: 2, 128>}, {pipeline_mode = #tpu.pipeline_mode<synchronous>, transform_indices = @transform_2, window_bounds = array<i64: 1, 2>}, {transform_indices = @transform_3, window_bounds = array<i64: 2, 2>}]} {
    %c0 = arith.constant 0 : index
    %c0_0 = arith.constant 0 : index
    %0 = vector.load %arg1[%c0, %c0_0] : memref<2x128xf32, #tpu.memory_space<vmem>>, vector<2x128xf32>
    %c0_1 = arith.constant 0 : index
    %c0_2 = arith.constant 0 : index
    %1 = vector.load %arg2[%c0_1, %c0_2] : memref<2x128xf32, #tpu.memory_space<vmem>>, vector<2x128xf32>
    %cst = arith.constant dense<0.000000e+00> : vector<2x2xf32>
    %2 = tpu.matmul %0, %1, %cst {dimension_numbers = #tpu.dot_dimension_numbers<[1], [1], [0], [0], [0, 0, 1, 0], [], []>} : vector<2x128xf32>, vector<2x128xf32>, vector<2x2xf32> -> vector<2x2xf32>
    %c0_3 = arith.constant 0 : index
    %c0_4 = arith.constant 0 : index
    %3 = vector.load %arg3[%c0_3, %c0_4] : memref<1x2xf32, #tpu.memory_space<vmem>>, vector<1x2xf32>
    %4 = vector.broadcast %3 : vector<1x2xf32> to vector<2x2xf32>
    %5 = arith.addf %2, %4 : vector<2x2xf32>
    %c0_5 = arith.constant 0 : index
    %c0_6 = arith.constant 0 : index
    %6 = vector.load %arg4[%c0_5, %c0_6] : memref<2x2xf32, #tpu.memory_space<vmem>>, vector<2x2xf32>
    tpu.vector_store %arg4[%c0_5, %c0_6], %5 {strides = array<i32>} : memref<2x2xf32, #tpu.memory_space<vmem>>, vector<2x2xf32>,
    return
  }
  func.func @transform_0(%arg0: i32) -> (i32, i32) {
    %c0_i32 = arith.constant 0 : i32
    %c0_i32_0 = arith.constant 0 : i32
    return %arg0, %c0_i32 : i32, i32
  }
  func.func @transform_1(%arg0: i32) -> (i32, i32) {
    %c0_i32 = arith.constant 0 : i32
    %c0_i32_0 = arith.constant 0 : i32
    %c0_i32_1 = arith.constant 0 : i32
    return %c0_i32, %c0_i32_0 : i32, i32
  }
  func.func @transform_2(%arg0: i32) -> (i32, i32) {
    %c0_i32 = arith.constant 0 : i32
    %c0_i32_0 = arith.constant 0 : i32
    %c0_i32_1 = arith.constant 0 : i32
    return %c0_i32, %c0_i32_0 : i32, i32
  }
  func.func @transform_3(%arg0: i32) -> (i32, i32) {
    %c0_i32 = arith.constant 0 : i32
    %c0_i32_0 = arith.constant 0 : i32
    return %arg0, %c0_i32 : i32, i32
  }
}

</mosaic_0001>

<llo_original>
// kernel: classification_head.3
$region0: #{classification_head.3}
  #allocation0 [shape = 'u32[]', space=smem, size = 0x4, offset = 0x4, fixed_abs, tag = 'smem constant byte address 0x4 - core index']
  #allocation1 [shape = 'u32[144,128]{1,0:T(1,128)}', space=vmem, size = 0x12000, scoped, tag = 'internal scratch']
  %s0 = inlined_call_operand.vmem [shape: f32[2,128], index: 0, kind: input, shape index: {}]
  %s1 = inlined_call_operand.vmem [shape: f32[2,128], index: 1, kind: input, shape index: {}]
  %s2 = inlined_call_operand.vmem [shape: f32[1,2], index: 2, kind: input, shape index: {}]
  %s3 = inlined_call_operand.hbm [shape: f32[2,2], index: 3, kind: output, shape index: {}]
  %s4 = sld [smem:[#allocation0]]
  $region22: #{classification_head.3} parent=0
    _
  %s6 = ssub.s32 1, %s4
  %s7 = scalar_select 0, %s6, %s4
  $region1: #{classification_head.3} parent=0
    #allocation2 [shape = 'u8[1024]{0}', space=vmem, size = 0x400, scoped, tag = 'output window, operand 0, single buffered']
    #allocation3 [shape = 's32[1]{0}', space=sflag, size = 0x4, scoped, tag = 'scoped memory for classification_head.3']
    %8 = vsyncpa [#allocation3], 0
    // Predicated region
    $region2: #{classification_head.3} parent=1 // pred_check
      _
    $region3: #{classification_head.3} parent=1 // pred_check_branch
      %10 = sbr.rel (0) target = $region5
    $region4: #{classification_head.3} parent=1 // pred_region
      _
    $region5: #{classification_head.3} parent=1 // pred_fallthru
      _
    // Predicated region
    $region6: #{classification_head.3} parent=1 // pred_check
      _
    $region7: #{classification_head.3} parent=1 // pred_check_branch
      %12 = sbr.rel (0) target = $region9
    $region8: #{classification_head.3} parent=1 // pred_region
      _
    $region9: #{classification_head.3} parent=1 // pred_fallthru
      _
    // Predicated region
    $region10: #{classification_head.3} parent=1 // pred_check
      _
    $region11: #{classification_head.3} parent=1 // pred_check_branch
      %14 = sbr.rel (0) target = $region13
    $region12: #{classification_head.3} parent=1 // pred_region
      _
    $region13: #{classification_head.3} parent=1 // pred_fallthru
      _
    %v15 = vld [vmem:[%s0] sm:$0x3]
    %v16 = vld [vmem:[%s1] sm:$0x3]
    %v17 = vld [vmem:[%s2] sm:$0x1]
    %v19 = vlaneseq
    %v20 = vshrl.u32 %v19, 7
    %v21 = vsub.s32 0, %v20
    %v22 = vrot.slane %v17, %v21
    %24 = vmatprep.subr.mxu0 0.0
    %25 = vmatpush1.xpose.msra.mxu0 %v16
    %26 = vmatprep.subr.mxu0 0.0
    %27 = vmatpush1.xpose.msra.mxu0 0.0
    %28 = vmatprep.subr.mxu0 0.0
    %29 = vmatpush1.xpose.msra.mxu0 0.0
    %30 = vmatprep.subr.mxu0 0.0
    %31 = vmatpush1.xpose.msra.mxu0 0.0
    %32 = vmatprep.subr.mxu0 0.0
    %33 = vmatpush1.xpose.msra.mxu0 0.0
    %34 = vmatprep.subr.mxu0 0.0
    %35 = vmatpush1.xpose.msra.mxu0 0.0
    %36 = vmatprep.subr.mxu0 0.0
    %37 = vmatpush1.xpose.msra.mxu0 0.0
    %38 = vmatprep.subr.mxu0 0.0
    %39 = vmatpush1.xpose.msra.mxu0 0.0
    %40 = vmatprep.subr.mxu0 0.0
    %41 = vmatpush1.xpose.msra.mxu0 0.0
    %42 = vmatprep.subr.mxu0 0.0
    %43 = vmatpush1.xpose.msra.mxu0 0.0
    %44 = vmatprep.subr.mxu0 0.0
    %45 = vmatpush1.xpose.msra.mxu0 0.0
    %46 = vmatprep.subr.mxu0 0.0
    %47 = vmatpush1.xpose.msra.mxu0 0.0
    %48 = vmatprep.subr.mxu0 0.0
    %49 = vmatpush1.xpose.msra.mxu0 0.0
    %50 = vmatprep.subr.mxu0 0.0
    %51 = vmatpush1.xpose.msra.mxu0 0.0
    %52 = vmatprep.subr.mxu0 0.0
    %53 = vmatpush1.xpose.msra.mxu0 0.0
    %54 = vmatprep.subr.mxu0 0.0
    %55 = vmatpush1.xpose.msra.mxu0 0.0
    %56 = vmatprep.subr.mxu0 0.0
    %57 = vmatpush1.xpose.msra.mxu0 0.0
    %58 = vmatprep.subr.mxu0 0.0
    %59 = vmatpush1.xpose.msra.mxu0 0.0
    %60 = vmatprep.subr.mxu0 0.0
    %61 = vmatpush1.xpose.msra.mxu0 0.0
    %62 = vmatprep.subr.mxu0 0.0
    %63 = vmatpush1.xpose.msra.mxu0 0.0
    %64 = vmatprep.subr.mxu0 0.0
    %65 = vmatpush1.xpose.msra.mxu0 0.0
    %66 = vmatprep.subr.mxu0 0.0
    %67 = vmatpush1.xpose.msra.mxu0 0.0
    %68 = vmatprep.subr.mxu0 0.0
    %69 = vmatpush1.xpose.msra.mxu0 0.0
    %70 = vmatprep.subr.mxu0 0.0
    %71 = vmatpush1.xpose.msra.mxu0 0.0
    %72 = vmatprep.subr.mxu0 0.0
    %73 = vmatpush1.xpose.msra.mxu0 0.0
    %74 = vmatprep.subr.mxu0 0.0
    %75 = vmatpush1.xpose.msra.mxu0 0.0
    %76 = vmatprep.subr.mxu0 0.0
    %77 = vmatpush1.xpose.msra.mxu0 0.0
    %78 = vmatprep.subr.mxu0 0.0
    %79 = vmatpush1.xpose.msra.mxu0 0.0
    %80 = vmatprep.subr.mxu0 0.0
    %81 = vmatpush1.xpose.msra.mxu0 0.0
    %82 = vmatprep.subr.mxu0 0.0
    %83 = vmatpush1.xpose.msra.mxu0 0.0
    %84 = vmatprep.subr.mxu0 0.0
    %85 = vmatpush1.xpose.msra.mxu0 0.0
    %86 = vmatprep.subr.mxu0 0.0
    %87 = vmatpush1.xpose.msra.mxu0 0.0
    %88 = vmatprep.mubr.f32.mxu0 0.0
    %89 = vmatmul.mubr.f32.gmra.mrb[0].mxu0 %v15
    %v90 = vpop.f32.mrb[0].mxu0
    %v91 = vadd.f32 %v22, %v90
    %v92 = vpop.f32.mrb[0].mxu0
    %93 = vdwg.mxu0
    %vm94 = vcmask 9216
    %95 = vst.msk [vmem:[#allocation2] sm:$0x3] %vm94, %v91
    // Predicated region
    $region14: #{classification_head.3} parent=1 // pred_check
      _
    $region15: #{classification_head.3} parent=1 // pred_check_branch
      %97 = sbr.rel (0) target = $region17
    $region16: #{classification_head.3} parent=1 // pred_region
      %s99 = ssub.s32 32, 32
      %100 = vsyncadd [#allocation3], %s99
      %s102 = sshll.u32 [#allocation2], 4
      %s103 = int_to_ptr.vmem [resolvable:$true] %s102
      %105 = dma.vmem_to_hbm [thread:$0]  %s103, 32, %s3, [#allocation3]
    $region17: #{classification_head.3} parent=1 // pred_fallthru
      _
    // Predicated region
    $region18: #{classification_head.3} parent=1 // pred_check
      _
    $region19: #{classification_head.3} parent=1 // pred_check_branch
      %107 = sbr.rel (0) target = $region21
    $region20: #{classification_head.3} parent=1 // pred_region
      %108 = dma.done [#allocation3], 32
    $region21: #{classification_head.3} parent=1 // pred_fallthru
      _
    %109 = vsyncpa [#allocation3], 1

// kernel: classification_head.2
$region0: #{classification_head.2}
  #allocation0 [shape = 'u32[]', space=smem, size = 0x4, offset = 0x4, fixed_abs, tag = 'smem constant byte address 0x4 - core index']
  #allocation1 [shape = 'u32[144,128]{1,0:T(1,128)}', space=vmem, size = 0x12000, scoped, tag = 'internal scratch']
  %s0 = inlined_call_operand.vmem [shape: f32[16,256], index: 0, kind: input, shape index: {}]
  %s1 = inlined_call_operand.vmem [shape: f32[16,16], index: 1, kind: output, shape index: {}]
  %s2 = sld [smem:[#allocation0]]
  $region37: #{classification_head.2} parent=0
    _
  %s4 = ssub.s32 1, %s2
  %s5 = scalar_select 0, %s4, %s2
  loop: start=0, step=1, limit=4
  $region2: #{classification_head.2} parent=0 // loop_pre_header
    _
  $region3: #{classification_head.2} parent=0 // loop_header
    %s7 = sphi 0, %s11
    %p8 = scmp.ge.s32.totalorder %s7, 4
    %s17 = sphi 0, %s19
    %s20 = sphi 0, %s17
    %s21 = sphi 0, %s20
    %s37 = sphi 0, %s21
    %s43 = sphi 0, %s45
    %s46 = sphi 0, %s43
    %s47 = sphi 0, %s46
    %s63 = sphi 0, %s47
  $region4: #{classification_head.2} parent=0 // loop_header_branch
    %10 = sbr.rel (%p8) target = $region8
  $region5: #{classification_head.2} parent=0 // loop_body
    %s12 = ssub.s32 %s7, 1
    %s13 = ssub.s32 %s7, 2
    %s14 = sadd.s32 %s7, 1
    %s15 = ssub.s32 %s7, %s14
    %p16 = scmp.eq.s32.totalorder %s15, 0
    %s18 = sadd.s32 %s17, 1
    %s19 = scalar_select %p16, %s17, %s18
    %p22 = pneg %p16
    %p23 = scmp.eq.s32.totalorder %s7, 1
    %p24 = por %p22, %p23
    %p25 = scmp.ne.s32.totalorder %s17, %s20
    %p26 = scmp.eq.s32.totalorder %s7, 0
    %p27 = por %p25, %p26
    %p28 = scmp.ne.s32.totalorder %s17, %s20
    %p29 = scmp.eq.s32.totalorder %s12, 1
    %p30 = por %p28, %p29
    %p31 = scmp.ne.s32.totalorder %s20, %s21
    %p32 = scmp.eq.s32.totalorder %s12, 0
    %p33 = por %p31, %p32
    %p34 = scmp.ne.s32.totalorder %s20, %s21
    %p35 = scmp.eq.s32.totalorder %s13, 1
    %p36 = por %p34, %p35
    %p38 = scmp.ne.s32.totalorder %s21, %s37
    %p39 = scmp.eq.s32.totalorder %s13, 0
    %p40 = por %p38, %p39
    %s41 = ssub.s32 %s7, %s14
    %p42 = scmp.eq.s32.totalorder %s41, 0
    %s44 = sadd.s32 %s43, 1
    %s45 = scalar_select %p42, %s43, %s44
    %p48 = pneg %p42
    %p49 = scmp.eq.s32.totalorder %s7, 1
    %p50 = por %p48, %p49
    %p51 = scmp.ne.s32.totalorder %s43, %s46
    %p52 = scmp.eq.s32.totalorder %s7, 0
    %p53 = por %p51, %p52
    %p54 = scmp.ne.s32.totalorder %s43, %s46
    %p55 = scmp.eq.s32.totalorder %s12, 1
    %p56 = por %p54, %p55
    %p57 = scmp.ne.s32.totalorder %s46, %s47
    %p58 = scmp.eq.s32.totalorder %s12, 0
    %p59 = por %p57, %p58
    %p60 = scmp.ne.s32.totalorder %s46, %s47
    %p61 = scmp.eq.s32.totalorder %s13, 1
    %p62 = por %p60, %p61
    %p64 = scmp.ne.s32.totalorder %s47, %s63
    %p65 = scmp.eq.s32.totalorder %s13, 0
    %p66 = por %p64, %p65
    %p67 = scmp.le.s32.totalorder 1, %s7
    %p68 = scmp.lt.s32.totalorder %s7, 3
    %p69 = pnand %p67, %p68
    %p70 = pneg %p69
    // Predicated region
    $region9: #{classification_head.2} parent=5 // pred_check
      _
    $region10: #{classification_head.2} parent=5 // pred_check_branch
      %72 = sbr.rel (%p69) target = $region12
    $region11: #{classification_head.2} parent=5 // pred_region
      %s73 = ssub.s32 %s7, 1
    $region12: #{classification_head.2} parent=5 // pred_fallthru
      _
    %p74 = scmp.lt.s32.totalorder %s7, 2
    // Predicated region
    $region13: #{classification_head.2} parent=5 // pred_check
      %p75 = pneg %p74
    $region14: #{classification_head.2} parent=5 // pred_check_branch
      %77 = sbr.rel (%p75) target = $region16
    $region15: #{classification_head.2} parent=5 // pred_region
      // Predicated region
      $region17: #{classification_head.2} parent=15 // pred_check
        %p78 = pneg %p27
      $region18: #{classification_head.2} parent=15 // pred_check_branch
        %80 = sbr.rel (%p78) target = $region20
      $region19: #{classification_head.2} parent=15 // pred_region
        %p81 = scmp.lt.s32.totalorder %s7, 1
        %s82 = scalar_select %p81, %s7, 1
        %s83 = smul.addr %s82, 2
        %s84 = smul.addr %s83, 8
        %s85 = scalar_lea.vmem %s0, %s84
      $region20: #{classification_head.2} parent=15 // pred_fallthru
        _
    $region16: #{classification_head.2} parent=5 // pred_fallthru
      _
    %p86 = scmp.le.s32.totalorder 1, %s7
    %p87 = scmp.lt.s32.totalorder %s7, 3
    %p88 = pnand %p86, %p87
    %p89 = pneg %p88
    // Predicated region
    $region21: #{classification_head.2} parent=5 // pred_check
      _
    $region22: #{classification_head.2} parent=5 // pred_check_branch
      %91 = sbr.rel (%p88) target = $region24
    $region23: #{classification_head.2} parent=5 // pred_region
      %s92 = ssub.s32 %s7, 1
      %p93 = scmp.lt.s32.totalorder %s12, 1
      %s94 = scalar_select %p93, %s12, 1
      %s95 = smul.addr %s94, 2
      %s96 = smul.addr %s95, 8
      %s97 = scalar_lea.vmem %s0, %s96
      %p98 = pneg %p33
      %p99 = pneg %p30
      %p100 = pneg %p59
      %p101 = pneg %p56
      %p102 = scmp.lt.s32.totalorder %s12, 1
      %s103 = scalar_select %p102, %s12, 1
      %s104 = smul.addr %s103, 8
      %s105 = scalar_lea.vmem %s1, %s104
      %p106 = scmp.lt.s32.totalorder %s12, 1
      %s107 = scalar_select %p106, %s12, 1
      %s108 = smul.addr %s107, 2
      %s109 = smul.addr %s108, 8
      %s110 = scalar_lea.vmem %s0, %s109
      %p111 = scmp.lt.s32.totalorder %s12, 1
      %s112 = scalar_select %p111, %s12, 1
      %s113 = smul.addr %s112, 8
      %s114 = scalar_lea.vmem %s1, %s113
      %v116 = vld [vmem:[%s110] sm:$0xff]
      %v117 = vld [vmem:[%s110 + $0x8] sm:$0xff]
      %vm118 = vcmp.ne.f32.partialorder %v116, %v116
      %vm119 = vcmp.ne.f32.partialorder %v117, %v117
      %vm120 = vmxor %vm118, 1
      %vm121 = vmxor %vm119, 1
      %v122 = vsel %vm120, %v116, 0.0
      %v123 = vsel %vm121, %v117, 0.0
      %v124 = vlaneseq
      %v125 = vshrl.u32 %v124, 7
      %v126 = vadd.s32 %v125, 8
      %v127 = vadd.s32 %v125, 16
      %v128 = vadd.s32 %v125, 24
      %v129 = vadd.s32 %v125, 32
      %v130 = vadd.s32 %v125, 40
      %v131 = vadd.s32 %v125, 48
      %v132 = vadd.s32 %v125, 56
      %v133 = vadd.s32 %v125, 64
      %v134 = vadd.s32 %v125, 72
      %v135 = vadd.s32 %v125, 80
      %v136 = vadd.s32 %v125, 88
      %v137 = vadd.s32 %v125, 96
      %v138 = vadd.s32 %v125, 104
      %v139 = vadd.s32 %v125, 112
      %v140 = vadd.s32 %v125, 120
      %v141 = vadd.s32 %v125, 128
      %v142 = vadd.s32 %v125, 136
      %v143 = vadd.s32 %v125, 144
      %v144 = vadd.s32 %v125, 152
      %v145 = vadd.s32 %v125, 160
      %v146 = vadd.s32 %v125, 168
      %v147 = vadd.s32 %v125, 176
      %v148 = vadd.s32 %v125, 184
      %v149 = vadd.s32 %v125, 192
      %v150 = vadd.s32 %v125, 200
      %v151 = vadd.s32 %v125, 208
      %v152 = vadd.s32 %v125, 216
      %v153 = vadd.s32 %v125, 224
      %v154 = vadd.s32 %v125, 232
      %v155 = vadd.s32 %v125, 240
      %v156 = vadd.s32 %v125, 248
      %v157 = vlaneseq
      %v158 = vand.u32 %v157, 127
      %v159 = vmul.u32 %v158, 16
      %vm160 = vcmp.ge.s32.totalorder %v125, %v159
      %vm161 = vcmp.ge.s32.totalorder %v126, %v159
      %vm162 = vcmp.ge.s32.totalorder %v127, %v159
      %vm163 = vcmp.ge.s32.totalorder %v128, %v159
      %vm164 = vcmp.ge.s32.totalorder %v129, %v159
      %vm165 = vcmp.ge.s32.totalorder %v130, %v159
      %vm166 = vcmp.ge.s32.totalorder %v131, %v159
      %vm167 = vcmp.ge.s32.totalorder %v132, %v159
      %vm168 = vcmp.ge.s32.totalorder %v133, %v159
      %vm169 = vcmp.ge.s32.totalorder %v134, %v159
      %vm170 = vcmp.ge.s32.totalorder %v135, %v159
      %vm171 = vcmp.ge.s32.totalorder %v136, %v159
      %vm172 = vcmp.ge.s32.totalorder %v137, %v159
      %vm173 = vcmp.ge.s32.totalorder %v138, %v159
      %vm174 = vcmp.ge.s32.totalorder %v139, %v159
      %vm175 = vcmp.ge.s32.totalorder %v140, %v159
      %vm176 = vcmp.ge.s32.totalorder %v141, %v159
      %vm177 = vcmp.ge.s32.totalorder %v142, %v159
      %vm178 = vcmp.ge.s32.totalorder %v143, %v159
      %vm179 = vcmp.ge.s32.totalorder %v144, %v159
      %vm180 = vcmp.ge.s32.totalorder %v145, %v159
      %vm181 = vcmp.ge.s32.totalorder %v146, %v159
      %vm182 = vcmp.ge.s32.totalorder %v147, %v159
      %vm183 = vcmp.ge.s32.totalorder %v148, %v159
      %vm184 = vcmp.ge.s32.totalorder %v149, %v159
      %vm185 = vcmp.ge.s32.totalorder %v150, %v159
      %vm186 = vcmp.ge.s32.totalorder %v151, %v159
      %vm187 = vcmp.ge.s32.totalorder %v152, %v159
      %vm188 = vcmp.ge.s32.totalorder %v153, %v159
      %vm189 = vcmp.ge.s32.totalorder %v154, %v159
      %vm190 = vcmp.ge.s32.totalorder %v155, %v159
      %vm191 = vcmp.ge.s32.totalorder %v156, %v159
      %v192 = vadd.s32 %v158, 1
      %v193 = vmul.u32 %v192, 16
      %vm194 = vcmp.lt.s32.totalorder %v125, %v193
      %vm195 = vcmp.lt.s32.totalorder %v126, %v193
      %vm196 = vcmp.lt.s32.totalorder %v127, %v193
      %vm197 = vcmp.lt.s32.totalorder %v128, %v193
      %vm198 = vcmp.lt.s32.totalorder %v129, %v193
      %vm199 = vcmp.lt.s32.totalorder %v130, %v193
      %vm200 = vcmp.lt.s32.totalorder %v131, %v193
      %vm201 = vcmp.lt.s32.totalorder %v132, %v193
      %vm202 = vcmp.lt.s32.totalorder %v133, %v193
      %vm203 = vcmp.lt.s32.totalorder %v134, %v193
      %vm204 = vcmp.lt.s32.totalorder %v135, %v193
      %vm205 = vcmp.lt.s32.totalorder %v136, %v193
      %vm206 = vcmp.lt.s32.totalorder %v137, %v193
      %vm207 = vcmp.lt.s32.totalorder %v138, %v193
      %vm208 = vcmp.lt.s32.totalorder %v139, %v193
      %vm209 = vcmp.lt.s32.totalorder %v140, %v193
      %vm210 = vcmp.lt.s32.totalorder %v141, %v193
      %vm211 = vcmp.lt.s32.totalorder %v142, %v193
      %vm212 = vcmp.lt.s32.totalorder %v143, %v193
      %vm213 = vcmp.lt.s32.totalorder %v144, %v193
      %vm214 = vcmp.lt.s32.totalorder %v145, %v193
      %vm215 = vcmp.lt.s32.totalorder %v146, %v193
      %vm216 = vcmp.lt.s32.totalorder %v147, %v193
      %vm217 = vcmp.lt.s32.totalorder %v148, %v193
      %vm218 = vcmp.lt.s32.totalorder %v149, %v193
      %vm219 = vcmp.lt.s32.totalorder %v150, %v193
      %vm220 = vcmp.lt.s32.totalorder %v151, %v193
      %vm221 = vcmp.lt.s32.totalorder %v152, %v193
      %vm222 = vcmp.lt.s32.totalorder %v153, %v193
      %vm223 = vcmp.lt.s32.totalorder %v154, %v193
      %vm224 = vcmp.lt.s32.totalorder %v155, %v193
      %vm225 = vcmp.lt.s32.totalorder %v156, %v193
      %vm226 = vmand %vm160, %vm194
      %vm227 = vmand %vm161, %vm195
      %vm228 = vmand %vm162, %vm196
      %vm229 = vmand %vm163, %vm197
      %vm230 = vmand %vm164, %vm198
      %vm231 = vmand %vm165, %vm199
      %vm232 = vmand %vm166, %vm200
      %vm233 = vmand %vm167, %vm201
      %vm234 = vmand %vm168, %vm202
      %vm235 = vmand %vm169, %vm203
      %vm236 = vmand %vm170, %vm204
      %vm237 = vmand %vm171, %vm205
      %vm238 = vmand %vm172, %vm206
      %vm239 = vmand %vm173, %vm207
      %vm240 = vmand %vm174, %vm208
      %vm241 = vmand %vm175, %vm209
      %vm242 = vmand %vm176, %vm210
      %vm243 = vmand %vm177, %vm211
      %vm244 = vmand %vm178, %vm212
      %vm245 = vmand %vm179, %vm213
      %vm246 = vmand %vm180, %vm214
      %vm247 = vmand %vm181, %vm215
      %vm248 = vmand %vm182, %vm216
      %vm249 = vmand %vm183, %vm217
      %vm250 = vmand %vm184, %vm218
      %vm251 = vmand %vm185, %vm219
      %vm252 = vmand %vm186, %vm220
      %vm253 = vmand %vm187, %vm221
      %vm254 = vmand %vm188, %vm222
      %vm255 = vmand %vm189, %vm223
      %vm256 = vmand %vm190, %vm224
      %vm257 = vmand %vm191, %vm225
      %v258 = vsel %vm226, 1, 0
      %v259 = vsel %vm227, 1, 0
      %v260 = vsel %vm228, 1, 0
      %v261 = vsel %vm229, 1, 0
      %v262 = vsel %vm230, 1, 0
      %v263 = vsel %vm231, 1, 0
      %v264 = vsel %vm232, 1, 0
      %v265 = vsel %vm233, 1, 0
      %v266 = vsel %vm234, 1, 0
      %v267 = vsel %vm235, 1, 0
      %v268 = vsel %vm236, 1, 0
      %v269 = vsel %vm237, 1, 0
      %v270 = vsel %vm238, 1, 0
      %v271 = vsel %vm239, 1, 0
      %v272 = vsel %vm240, 1, 0
      %v273 = vsel %vm241, 1, 0
      %v274 = vsel %vm242, 1, 0
      %v275 = vsel %vm243, 1, 0
      %v276 = vsel %vm244, 1, 0
      %v277 = vsel %vm245, 1, 0
      %v278 = vsel %vm246, 1, 0
      %v279 = vsel %vm247, 1, 0
      %v280 = vsel %vm248, 1, 0
      %v281 = vsel %vm249, 1, 0
      %v282 = vsel %vm250, 1, 0
      %v283 = vsel %vm251, 1, 0
      %v284 = vsel %vm252, 1, 0
      %v285 = vsel %vm253, 1, 0
      %v286 = vsel %vm254, 1, 0
      %v287 = vsel %vm255, 1, 0
      %v288 = vsel %vm256, 1, 0
      %v289 = vsel %vm257, 1, 0
      %v290 = vcvt.s32.f32 %v258
      %v291 = vcvt.s32.f32 %v259
      %v292 = vcvt.s32.f32 %v260
      %v293 = vcvt.s32.f32 %v261
      %v294 = vcvt.s32.f32 %v262
      %v295 = vcvt.s32.f32 %v263
      %v296 = vcvt.s32.f32 %v264
      %v297 = vcvt.s32.f32 %v265
      %v298 = vcvt.s32.f32 %v266
      %v299 = vcvt.s32.f32 %v267
      %v300 = vcvt.s32.f32 %v268
      %v301 = vcvt.s32.f32 %v269
      %v302 = vcvt.s32.f32 %v270
      %v303 = vcvt.s32.f32 %v271
      %v304 = vcvt.s32.f32 %v272
      %v305 = vcvt.s32.f32 %v273
      %v306 = vcvt.s32.f32 %v274
      %v307 = vcvt.s32.f32 %v275
      %v308 = vcvt.s32.f32 %v276
      %v309 = vcvt.s32.f32 %v277
      %v310 = vcvt.s32.f32 %v278
      %v311 = vcvt.s32.f32 %v279
      %v312 = vcvt.s32.f32 %v280
      %v313 = vcvt.s32.f32 %v281
      %v314 = vcvt.s32.f32 %v282
      %v315 = vcvt.s32.f32 %v283
      %v316 = vcvt.s32.f32 %v284
      %v317 = vcvt.s32.f32 %v285
      %v318 = vcvt.s32.f32 %v286
      %v319 = vcvt.s32.f32 %v287
      %v320 = vcvt.s32.f32 %v288
      %v321 = vcvt.s32.f32 %v289
      %322 = vmatprep.subr.mxu0 0.0
      %323 = vmatpush1.msra.mxu0 %v290
      %324 = vmatprep.subr.mxu0 0.0
      %325 = vmatpush1.msra.mxu0 %v291
      %326 = vmatprep.subr.mxu0 0.0
      %327 = vmatpush1.msra.mxu0 %v292
      %328 = vmatprep.subr.mxu0 0.0
      %329 = vmatpush1.msra.mxu0 %v293
      %330 = vmatprep.subr.mxu0 0.0
      %331 = vmatpush1.msra.mxu0 %v294
      %332 = vmatprep.subr.mxu0 0.0
      %333 = vmatpush1.msra.mxu0 %v295
      %334 = vmatprep.subr.mxu0 0.0
      %335 = vmatpush1.msra.mxu0 %v296
      %336 = vmatprep.subr.mxu0 0.0
      %337 = vmatpush1.msra.mxu0 %v297
      %338 = vmatprep.subr.mxu0 0.0
      %339 = vmatpush1.msra.mxu0 %v298
      %340 = vmatprep.subr.mxu0 0.0
      %341 = vmatpush1.msra.mxu0 %v299
      %342 = vmatprep.subr.mxu0 0.0
      %343 = vmatpush1.msra.mxu0 %v300
      %344 = vmatprep.subr.mxu0 0.0
      %345 = vmatpush1.msra.mxu0 %v301
      %346 = vmatprep.subr.mxu0 0.0
      %347 = vmatpush1.msra.mxu0 %v302
      %348 = vmatprep.subr.mxu0 0.0
      %349 = vmatpush1.msra.mxu0 %v303
      %350 = vmatprep.subr.mxu0 0.0
      %351 = vmatpush1.msra.mxu0 %v304
      %352 = vmatprep.subr.mxu0 0.0
      %353 = vmatpush1.msra.mxu0 %v305
      %354 = vmatprep.subr.mxu0 0.0
      %355 = vmatpush1.msra.mxu0 %v306
      %356 = vmatprep.subr.mxu0 0.0
      %357 = vmatpush1.msra.mxu0 %v307
      %358 = vmatprep.subr.mxu0 0.0
      %359 = vmatpush1.msra.mxu0 %v308
      %360 = vmatprep.subr.mxu0 0.0
      %361 = vmatpush1.msra.mxu0 %v309
      %362 = vmatprep.subr.mxu0 0.0
      %363 = vmatpush1.msra.mxu0 %v310
      %364 = vmatprep.subr.mxu0 0.0
      %365 = vmatpush1.msra.mxu0 %v311
      %366 = vmatprep.subr.mxu0 0.0
      %367 = vmatpush1.msra.mxu0 %v312
      %368 = vmatprep.subr.mxu0 0.0
      %369 = vmatpush1.msra.mxu0 %v313
      %370 = vmatprep.subr.mxu0 0.0
      %371 = vmatpush1.msra.mxu0 %v314
      %372 = vmatprep.subr.mxu0 0.0
      %373 = vmatpush1.msra.mxu0 %v315
      %374 = vmatprep.subr.mxu0 0.0
      %375 = vmatpush1.msra.mxu0 %v316
      %376 = vmatprep.subr.mxu0 0.0
      %377 = vmatpush1.msra.mxu0 %v317
      %378 = vmatprep.subr.mxu0 0.0
      %379 = vmatpush1.msra.mxu0 %v318
      %380 = vmatprep.subr.mxu0 0.0
      %381 = vmatpush1.msra.mxu0 %v319
      %382 = vmatprep.subr.mxu0 0.0
      %383 = vmatpush1.msra.mxu0 %v320
      %384 = vmatprep.subr.mxu0 0.0
      %385 = vmatpush1.msra.mxu0 %v321
      %386 = vmatprep.mubr.f32.mxu0 %v123
      %387 = vmatmul.mubr.f32.gmra.mrb[0].mxu0 %v122
      %v388 = vpop.f32.mrb[0].mxu0
      %v389 = vadd.f32 0.0, %v388
      %v390 = vpop.f32.mrb[0].mxu0
      %391 = vdwg.mxu0
      %v392 = vsel %vm120, 1, 0
      %v393 = vsel %vm121, 1, 0
      %v394 = vcvt.s32.f32 %v392
      %v395 = vcvt.s32.f32 %v393
      %v396 = vpack.c.bf16 %v394, %v394
      %v397 = vpack.c.bf16 %v395, %v395
      %v398 = vpack.c.bf16 %v291, %v290
      %v399 = vpack.c.bf16 %v293, %v292
      %v400 = vpack.c.bf16 %v295, %v294
      %v401 = vpack.c.bf16 %v297, %v296
      %v402 = vpack.c.bf16 %v299, %v298
      %v403 = vpack.c.bf16 %v301, %v300
      %v404 = vpack.c.bf16 %v303, %v302
      %v405 = vpack.c.bf16 %v305, %v304
      %v406 = vpack.c.bf16 %v307, %v306
      %v407 = vpack.c.bf16 %v309, %v308
      %v408 = vpack.c.bf16 %v311, %v310
      %v409 = vpack.c.bf16 %v313, %v312
      %v410 = vpack.c.bf16 %v315, %v314
      %v411 = vpack.c.bf16 %v317, %v316
      %v412 = vpack.c.bf16 %v319, %v318
      %v413 = vpack.c.bf16 %v321, %v320
      %414 = vmatprep.subr.bf16.mxu0 0
      %415 = vmatpush1.bf16.msra.mxu0 %v398
      %416 = vmatprep.subr.bf16.mxu0 0
      %417 = vmatpush1.bf16.msra.mxu0 %v399
      %418 = vmatprep.subr.bf16.mxu0 0
      %419 = vmatpush1.bf16.msra.mxu0 %v400
      %420 = vmatprep.subr.bf16.mxu0 0
      %421 = vmatpush1.bf16.msra.mxu0 %v401
      %422 = vmatprep.subr.bf16.mxu0 0
      %423 = vmatpush1.bf16.msra.mxu0 %v402
      %424 = vmatprep.subr.bf16.mxu0 0
      %425 = vmatpush1.bf16.msra.mxu0 %v403
      %426 = vmatprep.subr.bf16.mxu0 0
      %427 = vmatpush1.bf16.msra.mxu0 %v404
      %428 = vmatprep.subr.bf16.mxu0 0
      %429 = vmatpush1.bf16.msra.mxu0 %v405
      %430 = vmatprep.subr.bf16.mxu0 0
      %431 = vmatpush1.bf16.msra.mxu0 %v406
      %432 = vmatprep.subr.bf16.mxu0 0
      %433 = vmatpush1.bf16.msra.mxu0 %v407
      %434 = vmatprep.subr.bf16.mxu0 0
      %435 = vmatpush1.bf16.msra.mxu0 %v408
      %436 = vmatprep.subr.bf16.mxu0 0
      %437 = vmatpush1.bf16.msra.mxu0 %v409
      %438 = vmatprep.subr.bf16.mxu0 0
      %439 = vmatpush1.bf16.msra.mxu0 %v410
      %440 = vmatprep.subr.bf16.mxu0 0
      %441 = vmatpush1.bf16.msra.mxu0 %v411
      %442 = vmatprep.subr.bf16.mxu0 0
      %443 = vmatpush1.bf16.msra.mxu0 %v412
      %444 = vmatprep.subr.bf16.mxu0 0
      %445 = vmatpush1.bf16.msra.mxu0 %v413
      %446 = vmatprep.mubr.bf16.mxu0 %v397
      %447 = vmatmul.mubr.bf16.gmra.mrb[0].mxu0 %v396
      %v448 = vpop.f32.mrb[0].mxu0
      %v449 = vadd.f32 0.0, %v448
      %v450 = vpop.f32.mrb[0].mxu0
      %v451 = vpop.f32.mrb[0].mxu0
      %v452 = vpop.f32.mrb[0].mxu0
      %453 = vdwg.mxu0
      %v454 = vrcp.pop %v449
      %v455 = vmul.f32 %v389, %v454
      %vm456 = vcmask 130048
      %457 = vst.msk [vmem:[%s114] sm:$0xff] %vm456, %v455
      %p458 = scmp.lt.s32.totalorder %s12, 1
      %s459 = scalar_select %p458, %s12, 1
      %s460 = smul.addr %s459, 8
      %s461 = scalar_lea.vmem %s1, %s460
      // Predicated region
      $region25: #{classification_head.2} parent=23 // pred_check
        %p462 = pneg %p56
      $region26: #{classification_head.2} parent=23 // pred_check_branch
        %464 = sbr.rel (%p462) target = $region28
      $region27: #{classification_head.2} parent=23 // pred_region
        _
      $region28: #{classification_head.2} parent=23 // pred_fallthru
        _
    $region24: #{classification_head.2} parent=5 // pred_fallthru
      _
    %p465 = scmp.le.s32.totalorder 2, %s7
    // Predicated region
    $region29: #{classification_head.2} parent=5 // pred_check
      %p466 = pneg %p465
    $region30: #{classification_head.2} parent=5 // pred_check_branch
      %468 = sbr.rel (%p466) target = $region32
    $region31: #{classification_head.2} parent=5 // pred_region
      %s469 = ssub.s32 %s7, 2
      // Predicated region
      $region33: #{classification_head.2} parent=31 // pred_check
        %p470 = pneg %p62
      $region34: #{classification_head.2} parent=31 // pred_check_branch
        %472 = sbr.rel (%p470) target = $region36
      $region35: #{classification_head.2} parent=31 // pred_region
        %p473 = scmp.lt.s32.totalorder %s13, 1
        %s474 = scalar_select %p473, %s13, 1
        %s475 = smul.addr %s474, 8
        %s476 = scalar_lea.vmem %s1, %s475
      $region36: #{classification_head.2} parent=31 // pred_fallthru
        _
    $region32: #{classification_head.2} parent=5 // pred_fallthru
      _
  $region6: #{classification_head.2} parent=0 // loop_footer
    %s11 = sadd.s32 1, %s7
  $region7: #{classification_head.2} parent=0 // loop_footer_branch
    %6 = sbr.rel target = $region3
  $region8: #{classification_head.2} parent=0 // loop_exit
    _

</llo_original>
